<compile_context>
chip_gen: v7x
topology: tpu7x:2x2x1
jax: 0.10.0
libtpu: 0.0.40
codegen_flags: <defaults>
</compile_context>

<pallas_src>
import numpy as np
import jax
import jax.numpy as jnp
from jax.experimental import pallas as pl
from jax.experimental.pallas import tpu as pltpu


# ----------------------------- model dimensions ------------------------------
J_NUM = 8          # J_num
O_MAX_LEN = 8      # O_max_len
C_IN = 1           # conv input channels
C_OUT = 6          # conv output channels
KH = KW = 2        # conv kernel (stride 2)
KK = C_IN * KH * KW
JH, OW = J_NUM // 2, O_MAX_LEN // 2
P = JH * OW                         # conv output positions (16)
FEAT = P * KK                       # folded input feature width (64)
H1 = 258                            # fc1 / fc2 width (torch)
H1P = 384                           # padded fc width (multiple of 128)
N_ACT = 17                          # action logits (torch)
OUT_P = 128                         # padded output width (lane-dense stores)
BATCH = 2


# --------------------------------- kernel ------------------------------------
def cnn_fnn_kernel(x_ref, w1_ref, b1_ref, w2_ref, b2_ref, wo_ref, bo_ref, out_ref):
    # Straight-line fused MLP; conv already folded into w1 offline.
    # bf16 only on MXU operands; bias-add / ReLU / accumulation in f32.
    x = x_ref[...].astype(jnp.bfloat16)
    h1 = jnp.maximum(
        jnp.dot(x, w1_ref[...], preferred_element_type=jnp.float32) + b1_ref[...],
        0.0)
    h2 = jnp.maximum(
        jnp.dot(h1.astype(jnp.bfloat16), w2_ref[...],
                preferred_element_type=jnp.float32) + b2_ref[...],
        0.0)
    out_ref[...] = (
        jnp.dot(h2.astype(jnp.bfloat16), wo_ref[...],
                preferred_element_type=jnp.float32) + bo_ref[...]
    ).astype(out_ref.dtype)


# ----------------------- offline weight preparation ---------------------------
def prepare_params(params):
    """Fold conv into fc1, permute/pad/cast weights. Call ONCE at load time."""
    Wc, bc, W1, b1, W2, b2, Wo, bo = params

    # ---- fold conv into fc1 (torch flatten index f = c*P + p) ----
    wc_k = Wc.reshape(C_OUT, KK).T                              # (KK, C): [k, c]
    w1_k = jnp.transpose(W1.reshape(H1, C_OUT, P), (2, 1, 0))   # (P, C, H1)
    w_eff = jnp.einsum('kc,pch->pkh', wc_k, w1_k).reshape(FEAT, H1)   # rows = p*KK+k
    b1_eff = b1 + bc @ w1_k.sum(axis=0)                         # (H1,)

    # ---- bake the im2col permutation into the weight rows so the kernel can
    #      consume the raw NCHW flatten x.reshape(N, FEAT) directly ----
    perm = np.empty(FEAT, dtype=np.int32)
    i = 0
    for h in range(JH):
        for w in range(OW):
            for c in range(C_IN):
                for kh in range(KH):
                    for kw in range(KW):
                        perm[i] = (c * J_NUM * O_MAX_LEN
                                   + (h * KH + kh) * O_MAX_LEN + (w * KW + kw))
                        i += 1
    w_eff_x = jnp.zeros_like(w_eff).at[perm].set(w_eff)         # (FEAT, H1)

    # ---- zero-pad H1 258 -> 384 and out 17 -> 128 (inert: padded biases are 0) ----
    w1p = jnp.zeros((FEAT, H1P), jnp.float32).at[:, :H1].set(w_eff_x)
    b1p = jnp.zeros((1, H1P), jnp.float32).at[0, :H1].set(b1_eff)
    w2p = jnp.zeros((H1P, H1P), jnp.float32).at[:H1, :H1].set(W2.T)
    b2p = jnp.zeros((1, H1P), jnp.float32).at[0, :H1].set(b2)
    wop = jnp.zeros((H1P, OUT_P), jnp.float32).at[:H1, :N_ACT].set(Wo.T)
    bop = jnp.zeros((1, OUT_P), jnp.float32).at[0, :N_ACT].set(bo)

    # matmul operands in bf16 (halves weight DMA); biases stay f32.
    return (w1p.astype(jnp.bfloat16), b1p,
            w2p.astype(jnp.bfloat16), b2p,
            wop.astype(jnp.bfloat16), bop)


# -------------------------------- wrapper -------------------------------------
def cnn_fnn_forward(x, kparams, *, tm=256):
    """x: (N, C_IN, J, O) float32 NCHW. kparams: output of prepare_params (cached)."""
    w1p, b1p, w2p, b2p, wop, bop = kparams
    N = x.shape[0]
    x_flat = x.reshape(N, FEAT)          # raw flatten; permutation baked into w1p

    tm = min(tm, N)                      # batch tile (grid pipelines / shards it)
    grid_m = pl.cdiv(N, tm)

    vmem = pltpu.MemorySpace.VMEM
    const = lambda i: (0, 0)             # weights: same block every step -> VMEM-resident

    flops = int(2 * N * (FEAT * H1P + H1P * H1P + H1P * OUT_P))
    bytes_accessed = int(x_flat.size * 4 + N * OUT_P * 4
                         + (w1p.size + w2p.size + wop.size) * 2
                         + (b1p.size + b2p.size + bop.size) * 4)

    out = pl.pallas_call(
        cnn_fnn_kernel,
        out_shape=jax.ShapeDtypeStruct((N, OUT_P), jnp.float32),
        grid=(grid_m,),
        in_specs=[
            pl.BlockSpec((tm, FEAT), lambda i: (i, 0), memory_space=vmem),
            pl.BlockSpec((FEAT, H1P), const, memory_space=vmem),
            pl.BlockSpec((1, H1P), const, memory_space=vmem),
            pl.BlockSpec((H1P, H1P), const, memory_space=vmem),
            pl.BlockSpec((1, H1P), const, memory_space=vmem),
            pl.BlockSpec((H1P, OUT_P), const, memory_space=vmem),
            pl.BlockSpec((1, OUT_P), const, memory_space=vmem),
        ],
        out_specs=pl.BlockSpec((tm, OUT_P), lambda i: (i, 0), memory_space=vmem),
        compiler_params=pltpu.CompilerParams(
            dimension_semantics=("parallel",)),     # v7x: shard batch over 2 TCs
        cost_estimate=pl.CostEstimate(
            flops=flops, transcendentals=0, bytes_accessed=bytes_accessed),
    )(x_flat, w1p, b1p, w2p, b2p, wop, bop)

    return out[:, :N_ACT]                # drop inert output padding


# ------------------------- pure-JAX reference (check) -------------------------
def reference_forward(x, params):
    Wc, bc, W1, b1, W2, b2, Wo, bo = params
    N = x.shape[0]
    patches = (x.reshape(N, C_IN, JH, KH, OW, KW)
                 .transpose(0, 2, 4, 1, 3, 5)
                 .reshape(N, JH, OW, KK))
    co = jnp.einsum('nhwk,ck->nchw', patches, Wc.reshape(C_OUT, KK)) \
        + bc[None, :, None, None]
    flat = co.reshape(N, -1)                               # channel-major flatten
    h1 = jnp.maximum(flat @ W1.T + b1, 0.0)
    h2 = jnp.maximum(h1 @ W2.T + b2, 0.0)
    return h2 @ Wo.T + bo


# ------------------------------ deterministic init ----------------------------
def init_params(key):
    ks = jax.random.split(key, 8)
    F = C_OUT * P
    Wc = jax.random.normal(ks[0], (C_OUT, C_IN, KH, KW), jnp.float32) * 0.2
    bc = jax.random.normal(ks[1], (C_OUT,), jnp.float32) * 0.1
    W1 = jax.random.normal(ks[2], (H1, F), jnp.float32) * 0.1
    b1 = jax.random.normal(ks[3], (H1,), jnp.float32) * 0.1
    W2 = jax.random.normal(ks[4], (H1, H1), jnp.float32) * 0.05
    b2 = jax.random.normal(ks[5], (H1,), jnp.float32) * 0.1
    Wo = jax.random.normal(ks[6], (N_ACT, H1), jnp.float32) * 0.05
    bo = jax.random.normal(ks[7], (H1,), jnp.float32)[:N_ACT] * 0.1
    return (Wc, bc, W1, b1, W2, b2, Wo, bo)


if __name__ == "__main__":
    key = jax.random.PRNGKey(0)
    pkey, xkey = jax.random.split(key)
    params = init_params(pkey)
    kparams = prepare_params(params)     # done ONCE, reused every forward
    x = jax.random.normal(xkey, (BATCH, C_IN, J_NUM, O_MAX_LEN), jnp.float32)

    fwd = jax.jit(cnn_fnn_forward)
    out = jax.block_until_ready(fwd(x, kparams))

    ref = reference_forward(x, params)
    assert out.shape == (BATCH, N_ACT)
    # conv folded into fc1 reorders summation and weights are bf16 -> 1e-2 tolerance.
    assert jnp.allclose(out, ref, atol=1e-2, rtol=1e-2), "mismatch vs JAX reference"
    print("KERNEL_OK")
</pallas_src>

<mosaic_0001>
module attributes {stable_mosaic.version = 11 : i64} {
  func.func @cnn_fnn_kernel(%arg0: i32, %arg1: memref<2x64xf32, #tpu.memory_space<vmem>>, %arg2: memref<64x384xbf16, #tpu.memory_space<vmem>>, %arg3: memref<1x384xf32, #tpu.memory_space<vmem>>, %arg4: memref<384x384xbf16, #tpu.memory_space<vmem>>, %arg5: memref<1x384xf32, #tpu.memory_space<vmem>>, %arg6: memref<384x128xbf16, #tpu.memory_space<vmem>>, %arg7: memref<1x128xf32, #tpu.memory_space<vmem>>, %arg8: memref<2x128xf32, #tpu.memory_space<vmem>>) attributes {dimension_semantics = [#tpu.dimension_semantics<parallel>], iteration_bounds = array<i64: 1>, scalar_prefetch = 0 : i64, scratch_operands = 0 : i64, tpu.core_type = #tpu.core_type<tc>, window_params = [{transform_indices = @transform_0, window_bounds = array<i64: 2, 64>}, {pipeline_mode = #tpu.pipeline_mode<synchronous>, transform_indices = @transform_1, window_bounds = array<i64: 64, 384>}, {pipeline_mode = #tpu.pipeline_mode<synchronous>, transform_indices = @transform_2, window_bounds = array<i64: 1, 384>}, {pipeline_mode = #tpu.pipeline_mode<synchronous>, transform_indices = @transform_3, window_bounds = array<i64: 384, 384>}, {pipeline_mode = #tpu.pipeline_mode<synchronous>, transform_indices = @transform_4, window_bounds = array<i64: 1, 384>}, {pipeline_mode = #tpu.pipeline_mode<synchronous>, transform_indices = @transform_5, window_bounds = array<i64: 384, 128>}, {pipeline_mode = #tpu.pipeline_mode<synchronous>, transform_indices = @transform_6, window_bounds = array<i64: 1, 128>}, {transform_indices = @transform_7, window_bounds = array<i64: 2, 128>}]} {
    %c0 = arith.constant 0 : index
    %c0_0 = arith.constant 0 : index
    %0 = vector.load %arg1[%c0, %c0_0] : memref<2x64xf32, #tpu.memory_space<vmem>>, vector<2x64xf32>
    %1 = arith.truncf %0 : vector<2x64xf32> to vector<2x64xbf16>
    %c0_1 = arith.constant 0 : index
    %c0_2 = arith.constant 0 : index
    %2 = vector.load %arg2[%c0_1, %c0_2] : memref<64x384xbf16, #tpu.memory_space<vmem>>, vector<64x384xbf16>
    %cst = arith.constant dense<0.000000e+00> : vector<2x384xf32>
    %3 = tpu.matmul %1, %2, %cst {dimension_numbers = #tpu.dot_dimension_numbers<[1], [0], [0], [1], [0, 0, 1, 1], [], []>} : vector<2x64xbf16>, vector<64x384xbf16>, vector<2x384xf32> -> vector<2x384xf32>
    %c0_3 = arith.constant 0 : index
    %c0_4 = arith.constant 0 : index
    %4 = vector.load %arg3[%c0_3, %c0_4] : memref<1x384xf32, #tpu.memory_space<vmem>>, vector<1x384xf32>
    %5 = vector.broadcast %4 : vector<1x384xf32> to vector<2x384xf32>
    %6 = arith.addf %3, %5 : vector<2x384xf32>
    %cst_5 = arith.constant 0.000000e+00 : f32
    %7 = vector.broadcast %cst_5 : f32 to vector<2x384xf32>
    %8 = arith.maximumf %6, %7 : vector<2x384xf32>
    %9 = arith.truncf %8 : vector<2x384xf32> to vector<2x384xbf16>
    %c0_6 = arith.constant 0 : index
    %c0_7 = arith.constant 0 : index
    %10 = vector.load %arg4[%c0_6, %c0_7] : memref<384x384xbf16, #tpu.memory_space<vmem>>, vector<384x384xbf16>
    %cst_8 = arith.constant dense<0.000000e+00> : vector<2x384xf32>
    %11 = tpu.matmul %9, %10, %cst_8 {dimension_numbers = #tpu.dot_dimension_numbers<[1], [0], [0], [1], [0, 0, 1, 1], [], []>} : vector<2x384xbf16>, vector<384x384xbf16>, vector<2x384xf32> -> vector<2x384xf32>
    %c0_9 = arith.constant 0 : index
    %c0_10 = arith.constant 0 : index
    %12 = vector.load %arg5[%c0_9, %c0_10] : memref<1x384xf32, #tpu.memory_space<vmem>>, vector<1x384xf32>
    %13 = vector.broadcast %12 : vector<1x384xf32> to vector<2x384xf32>
    %14 = arith.addf %11, %13 : vector<2x384xf32>
    %cst_11 = arith.constant 0.000000e+00 : f32
    %15 = vector.broadcast %cst_11 : f32 to vector<2x384xf32>
    %16 = arith.maximumf %14, %15 : vector<2x384xf32>
    %17 = arith.truncf %16 : vector<2x384xf32> to vector<2x384xbf16>
    %c0_12 = arith.constant 0 : index
    %c0_13 = arith.constant 0 : index
    %18 = vector.load %arg6[%c0_12, %c0_13] : memref<384x128xbf16, #tpu.memory_space<vmem>>, vector<384x128xbf16>
    %cst_14 = arith.constant dense<0.000000e+00> : vector<2x128xf32>
    %19 = tpu.matmul %17, %18, %cst_14 {dimension_numbers = #tpu.dot_dimension_numbers<[1], [0], [0], [1], [0, 0, 1, 1], [], []>} : vector<2x384xbf16>, vector<384x128xbf16>, vector<2x128xf32> -> vector<2x128xf32>
    %c0_15 = arith.constant 0 : index
    %c0_16 = arith.constant 0 : index
    %20 = vector.load %arg7[%c0_15, %c0_16] : memref<1x128xf32, #tpu.memory_space<vmem>>, vector<1x128xf32>
    %21 = vector.broadcast %20 : vector<1x128xf32> to vector<2x128xf32>
    %22 = arith.addf %19, %21 : vector<2x128xf32>
    %c0_17 = arith.constant 0 : index
    %c0_18 = arith.constant 0 : index
    %23 = vector.load %arg8[%c0_17, %c0_18] : memref<2x128xf32, #tpu.memory_space<vmem>>, vector<2x128xf32>
    tpu.vector_store %arg8[%c0_17, %c0_18], %22 {strides = array<i32>} : memref<2x128xf32, #tpu.memory_space<vmem>>, vector<2x128xf32>,
    return
  }
  func.func @transform_0(%arg0: i32) -> (i32, i32) {
    %c0_i32 = arith.constant 0 : i32
    %c0_i32_0 = arith.constant 0 : i32
    return %arg0, %c0_i32 : i32, i32
  }
  func.func @transform_1(%arg0: i32) -> (i32, i32) {
    %c0_i32 = arith.constant 0 : i32
    %c0_i32_0 = arith.constant 0 : i32
    %c0_i32_1 = arith.constant 0 : i32
    return %c0_i32, %c0_i32_0 : i32, i32
  }
  func.func @transform_2(%arg0: i32) -> (i32, i32) {
    %c0_i32 = arith.constant 0 : i32
    %c0_i32_0 = arith.constant 0 : i32
    %c0_i32_1 = arith.constant 0 : i32
    return %c0_i32, %c0_i32_0 : i32, i32
  }
  func.func @transform_3(%arg0: i32) -> (i32, i32) {
    %c0_i32 = arith.constant 0 : i32
    %c0_i32_0 = arith.constant 0 : i32
    %c0_i32_1 = arith.constant 0 : i32
    return %c0_i32, %c0_i32_0 : i32, i32
  }
  func.func @transform_4(%arg0: i32) -> (i32, i32) {
    %c0_i32 = arith.constant 0 : i32
    %c0_i32_0 = arith.constant 0 : i32
    %c0_i32_1 = arith.constant 0 : i32
    return %c0_i32, %c0_i32_0 : i32, i32
  }
  func.func @transform_5(%arg0: i32) -> (i32, i32) {
    %c0_i32 = arith.constant 0 : i32
    %c0_i32_0 = arith.constant 0 : i32
    %c0_i32_1 = arith.constant 0 : i32
    return %c0_i32, %c0_i32_0 : i32, i32
  }
  func.func @transform_6(%arg0: i32) -> (i32, i32) {
    %c0_i32 = arith.constant 0 : i32
    %c0_i32_0 = arith.constant 0 : i32
    %c0_i32_1 = arith.constant 0 : i32
    return %c0_i32, %c0_i32_0 : i32, i32
  }
  func.func @transform_7(%arg0: i32) -> (i32, i32) {
    %c0_i32 = arith.constant 0 : i32
    %c0_i32_0 = arith.constant 0 : i32
    return %arg0, %c0_i32 : i32, i32
  }
}

</mosaic_0001>

<llo_original>
// kernel: cnn_fnn_forward.1
$region0: #{cnn_fnn_forward.1}
  #allocation0 [shape = 'u32[]', space=smem, size = 0x4, offset = 0x4, fixed_abs, tag = 'smem constant byte address 0x4 - core index']
  #allocation1 [shape = 'u32[144,128]{1,0:T(1,128)}', space=vmem, size = 0x12000, scoped, tag = 'internal scratch']
  %s0 = inlined_call_operand.vmem [shape: f32[2,64], index: 0, kind: input, shape index: {}]
  %s1 = inlined_call_operand.hbm [shape: bf16[64,384], index: 1, kind: input, shape index: {}]
  %s2 = inlined_call_operand.vmem [shape: f32[1,384], index: 2, kind: input, shape index: {}]
  %s3 = inlined_call_operand.hbm [shape: bf16[384,384], index: 3, kind: input, shape index: {}]
  %s4 = inlined_call_operand.vmem [shape: f32[1,384], index: 4, kind: input, shape index: {}]
  %s5 = inlined_call_operand.hbm [shape: bf16[384,128], index: 5, kind: input, shape index: {}]
  %s6 = inlined_call_operand.vmem [shape: f32[1,128], index: 6, kind: input, shape index: {}]
  %s7 = inlined_call_operand.hbm [shape: f32[2,128], index: 7, kind: output, shape index: {}]
  %s8 = sld [smem:[#allocation0]]
  $region50: #{cnn_fnn_forward.1} parent=0
    _
  %s10 = ssub.s32 1, %s8
  %s11 = scalar_select 0, %s10, %s8
  $region1: #{cnn_fnn_forward.1} parent=0
    #allocation2 [shape = 'u8[49152]{0}', space=vmem, size = 0xc000, scoped, tag = 'input window, operand 1, single buffered']
    #allocation3 [shape = 's32[1]{0}', space=sflag, size = 0x4, scoped, tag = 'scoped memory for cnn_fnn_forward.1']
    #allocation4 [shape = 's32[1]{0}', space=sflag, size = 0x4, scoped, tag = 'scoped memory for cnn_fnn_forward.1']
    #allocation5 [shape = 'u8[294912]{0}', space=vmem, size = 0x48000, scoped, tag = 'input window, operand 3, single buffered']
    #allocation6 [shape = 's32[1]{0}', space=sflag, size = 0x4, scoped, tag = 'scoped memory for cnn_fnn_forward.1']
    #allocation7 [shape = 'u8[98304]{0}', space=vmem, size = 0x18000, scoped, tag = 'input window, operand 5, single buffered']
    #allocation8 [shape = 'u8[1024]{0}', space=vmem, size = 0x400, scoped, tag = 'output window, operand 0, single buffered']
    %12 = vsyncpa [#allocation3], 0
    %13 = vsyncpa [#allocation6], 0
    %14 = vsyncpa [#allocation4], 0
    // Predicated region
    $region2: #{cnn_fnn_forward.1} parent=1 // pred_check
      _
    $region3: #{cnn_fnn_forward.1} parent=1 // pred_check_branch
      %16 = sbr.rel (0) target = $region5
    $region4: #{cnn_fnn_forward.1} parent=1 // pred_region
      _
    $region5: #{cnn_fnn_forward.1} parent=1 // pred_fallthru
      _
    // Predicated region
    $region6: #{cnn_fnn_forward.1} parent=1 // pred_check
      _
    $region7: #{cnn_fnn_forward.1} parent=1 // pred_check_branch
      %18 = sbr.rel (0) target = $region9
    $region8: #{cnn_fnn_forward.1} parent=1 // pred_region
      %s20 = ssub.s32 1536, 1536
      %21 = vsyncadd [#allocation3], %s20
      %s22 = sshll.u32 [#allocation2], 4
      %s23 = int_to_ptr.vmem [resolvable:$true] %s22
      %28 = dma.hbm_to_vmem [thread:$0]  %s1, 1536, %s23, [#allocation3], 192, 192, 12
    $region9: #{cnn_fnn_forward.1} parent=1 // pred_fallthru
      _
    // Predicated region
    $region10: #{cnn_fnn_forward.1} parent=1 // pred_check
      _
    $region11: #{cnn_fnn_forward.1} parent=1 // pred_check_branch
      %30 = sbr.rel (0) target = $region13
    $region12: #{cnn_fnn_forward.1} parent=1 // pred_region
      _
    $region13: #{cnn_fnn_forward.1} parent=1 // pred_fallthru
      _
    // Predicated region
    $region14: #{cnn_fnn_forward.1} parent=1 // pred_check
      _
    $region15: #{cnn_fnn_forward.1} parent=1 // pred_check_branch
      %32 = sbr.rel (0) target = $region17
    $region16: #{cnn_fnn_forward.1} parent=1 // pred_region
      %s34 = ssub.s32 9216, 9216
      %35 = vsyncadd [#allocation6], %s34
      %s36 = sshll.u32 [#allocation5], 4
      %s37 = int_to_ptr.vmem [resolvable:$true] %s36
      %42 = dma.hbm_to_vmem [thread:$0]  %s3, 9216, %s37, [#allocation6], 192, 192, 12
    $region17: #{cnn_fnn_forward.1} parent=1 // pred_fallthru
      _
    // Predicated region
    $region18: #{cnn_fnn_forward.1} parent=1 // pred_check
      _
    $region19: #{cnn_fnn_forward.1} parent=1 // pred_check_branch
      %44 = sbr.rel (0) target = $region21
    $region20: #{cnn_fnn_forward.1} parent=1 // pred_region
      _
    $region21: #{cnn_fnn_forward.1} parent=1 // pred_fallthru
      _
    // Predicated region
    $region22: #{cnn_fnn_forward.1} parent=1 // pred_check
      _
    $region23: #{cnn_fnn_forward.1} parent=1 // pred_check_branch
      %46 = sbr.rel (0) target = $region25
    $region24: #{cnn_fnn_forward.1} parent=1 // pred_region
      %s48 = ssub.s32 3072, 3072
      %49 = vsyncadd [#allocation6], %s48
      %s50 = sshll.u32 [#allocation7], 4
      %s51 = int_to_ptr.vmem [resolvable:$true] %s50
      %56 = dma.hbm_to_vmem [thread:$0]  %s5, 3072, %s51, [#allocation6], 64, 64, 4
    $region25: #{cnn_fnn_forward.1} parent=1 // pred_fallthru
      _
    // Predicated region
    $region26: #{cnn_fnn_forward.1} parent=1 // pred_check
      _
    $region27: #{cnn_fnn_forward.1} parent=1 // pred_check_branch
      %58 = sbr.rel (0) target = $region29
    $region28: #{cnn_fnn_forward.1} parent=1 // pred_region
      _
    $region29: #{cnn_fnn_forward.1} parent=1 // pred_fallthru
      _
    // Predicated region
    $region30: #{cnn_fnn_forward.1} parent=1 // pred_check
      _
    $region31: #{cnn_fnn_forward.1} parent=1 // pred_check_branch
      %60 = sbr.rel (0) target = $region33
    $region32: #{cnn_fnn_forward.1} parent=1 // pred_region
      %61 = dma.done [#allocation3], 1536
    $region33: #{cnn_fnn_forward.1} parent=1 // pred_fallthru
      _
    // Predicated region
    $region34: #{cnn_fnn_forward.1} parent=1 // pred_check
      _
    $region35: #{cnn_fnn_forward.1} parent=1 // pred_check_branch
      %63 = sbr.rel (0) target = $region37
    $region36: #{cnn_fnn_forward.1} parent=1 // pred_region
      %64 = dma.done [#allocation6], 9216
    $region37: #{cnn_fnn_forward.1} parent=1 // pred_fallthru
      _
    // Predicated region
    $region38: #{cnn_fnn_forward.1} parent=1 // pred_check
      _
    $region39: #{cnn_fnn_forward.1} parent=1 // pred_check_branch
      %66 = sbr.rel (0) target = $region41
    $region40: #{cnn_fnn_forward.1} parent=1 // pred_region
      %67 = dma.done [#allocation6], 3072
    $region41: #{cnn_fnn_forward.1} parent=1 // pred_fallthru
      _
    %v69 = vld [vmem:[%s0] sm:$0x3]
    %v70 = vpack.c.bf16 %v69, %v69
    %v71 = vld [vmem:[#allocation2] sm:$0xff]
    %v72 = vld [vmem:[#allocation2 + $0x8] sm:$0xf]
    %v73 = vld [vmem:[#allocation2 + $0xc] sm:$0xff]
    %v74 = vld [vmem:[#allocation2 + $0x14] sm:$0xf]
    %v75 = vld [vmem:[#allocation2 + $0x18] sm:$0xff]
    %v76 = vld [vmem:[#allocation2 + $0x20] sm:$0xf]
    %v77 = vld [vmem:[#allocation2 + $0x24] sm:$0xff]
    %v78 = vld [vmem:[#allocation2 + $0x2c] sm:$0xf]
    %v79 = vld [vmem:[#allocation2 + $0x30] sm:$0xff]
    %v80 = vld [vmem:[#allocation2 + $0x38] sm:$0xf]
    %v81 = vld [vmem:[#allocation2 + $0x3c] sm:$0xff]
    %v82 = vld [vmem:[#allocation2 + $0x44] sm:$0xf]
    %v83 = vld [vmem:[#allocation2 + $0x48] sm:$0xff]
    %v84 = vld [vmem:[#allocation2 + $0x50] sm:$0xf]
    %v85 = vld [vmem:[#allocation2 + $0x54] sm:$0xff]
    %v86 = vld [vmem:[#allocation2 + $0x5c] sm:$0xf]
    %v87 = vld [vmem:[%s2] sm:$0x7]
    %v89 = vlaneseq
    %v90 = vshrl.u32 %v89, 7
    %v91 = vsub.s32 0, %v90
    %v92 = vrot.slane %v87, %v91
    %v93 = vlaneseq
    %v94 = vshrl.u32 %v93, 7
    %v95 = vsub.s32 1, %v94
    %v96 = vrot.slane %v87, %v95
    %v97 = vlaneseq
    %v98 = vshrl.u32 %v97, 7
    %v99 = vsub.s32 2, %v98
    %v100 = vrot.slane %v87, %v99
    %v120 = vunpack.c.l.b16 %v71
    %v121 = vunpack.c.h.b16 %v71
    %v122 = vunpack.c.l.b16 %v72
    %v123 = vunpack.c.l.b16 %v73
    %v124 = vunpack.c.h.b16 %v73
    %v125 = vunpack.c.l.b16 %v74
    %v126 = vunpack.c.l.b16 %v75
    %v127 = vunpack.c.h.b16 %v75
    %v128 = vunpack.c.l.b16 %v76
    %v129 = vunpack.c.l.b16 %v77
    %v130 = vunpack.c.h.b16 %v77
    %v131 = vunpack.c.l.b16 %v78
    %v132 = vunpack.c.l.b16 %v79
    %v133 = vunpack.c.h.b16 %v79
    %v134 = vunpack.c.l.b16 %v80
    %v135 = vunpack.c.l.b16 %v81
    %v136 = vunpack.c.h.b16 %v81
    %v137 = vunpack.c.l.b16 %v82
    %v138 = vunpack.c.l.b16 %v83
    %v139 = vunpack.c.h.b16 %v83
    %v140 = vunpack.c.l.b16 %v84
    %v141 = vunpack.c.l.b16 %v85
    %v142 = vunpack.c.h.b16 %v85
    %v143 = vunpack.c.l.b16 %v86
    %v144 = vpack.c.b16 %v123, %v120
    %v145 = vpack.c.b16 %v124, %v121
    %v146 = vpack.c.b16 %v125, %v122
    %v147 = vpack.c.b16 %v129, %v126
    %v148 = vpack.c.b16 %v130, %v127
    %v149 = vpack.c.b16 %v131, %v128
    %v150 = vpack.c.b16 %v135, %v132
    %v151 = vpack.c.b16 %v136, %v133
    %v152 = vpack.c.b16 %v137, %v134
    %v153 = vpack.c.b16 %v141, %v138
    %v154 = vpack.c.b16 %v142, %v139
    %v155 = vpack.c.b16 %v143, %v140
    %vm168 = vcmask 523264
    %v170 = vsel %vm168, %v70, 0
    %172 = vmatprep.subr.bf16.mxu0 %v145
    %173 = vmatpush1.bf16.msra.mxu0 %v144
    %174 = vmatprep.subr.bf16.mxu0 %v148
    %175 = vmatpush1.bf16.msra.mxu0 %v147
    %176 = vmatprep.subr.bf16.mxu0 %v151
    %177 = vmatpush1.bf16.msra.mxu0 %v150
    %178 = vmatprep.subr.bf16.mxu0 %v154
    %179 = vmatpush1.bf16.msra.mxu0 %v153
    %180 = vmatprep.subr.bf16.mxu0 0
    %181 = vmatpush1.bf16.msra.mxu0 0
    %182 = vmatprep.subr.bf16.mxu0 0
    %183 = vmatpush1.bf16.msra.mxu0 0
    %184 = vmatprep.subr.bf16.mxu0 0
    %185 = vmatpush1.bf16.msra.mxu0 0
    %186 = vmatprep.subr.bf16.mxu0 0
    %187 = vmatpush1.bf16.msra.mxu0 0
    %188 = vmatprep.subr.bf16.mxu0 0
    %189 = vmatpush1.bf16.msra.mxu0 0
    %190 = vmatprep.subr.bf16.mxu0 0
    %191 = vmatpush1.bf16.msra.mxu0 0
    %192 = vmatprep.subr.bf16.mxu0 0
    %193 = vmatpush1.bf16.msra.mxu0 0
    %194 = vmatprep.subr.bf16.mxu0 0
    %195 = vmatpush1.bf16.msra.mxu0 0
    %196 = vmatprep.subr.bf16.mxu0 0
    %197 = vmatpush1.bf16.msra.mxu0 0
    %198 = vmatprep.subr.bf16.mxu0 0
    %199 = vmatpush1.bf16.msra.mxu0 0
    %200 = vmatprep.subr.bf16.mxu0 0
    %201 = vmatpush1.bf16.msra.mxu0 0
    %202 = vmatprep.subr.bf16.mxu0 0
    %203 = vmatpush1.bf16.msra.mxu0 0
    %204 = vmatprep.mubr.bf16.mxu0 0
    %205 = vmatmul.mubr.bf16.gmra.mrb[0].mxu0 %v170
    %v206 = vpop.f32.mrb[0].mxu0
    %v207 = vadd.f32 %v92, %v206
    %v208 = vpop.f32.mrb[0].mxu0
    %v209 = vadd.f32 %v96, %v208
    %v210 = vpop.f32.mrb[0].mxu0
    %v211 = vpop.f32.mrb[0].mxu0
    %212 = vdwg.mxu0
    %213 = vmatprep.subr.bf16.mxu0 0
    %214 = vmatpush1.bf16.msra.mxu0 %v146
    %215 = vmatprep.subr.bf16.mxu0 0
    %216 = vmatpush1.bf16.msra.mxu0 %v149
    %217 = vmatprep.subr.bf16.mxu0 0
    %218 = vmatpush1.bf16.msra.mxu0 %v152
    %219 = vmatprep.subr.bf16.mxu0 0
    %220 = vmatpush1.bf16.msra.mxu0 %v155
    %221 = vmatprep.subr.bf16.mxu0 0
    %222 = vmatpush1.bf16.msra.mxu0 0
    %223 = vmatprep.subr.bf16.mxu0 0
    %224 = vmatpush1.bf16.msra.mxu0 0
    %225 = vmatprep.subr.bf16.mxu0 0
    %226 = vmatpush1.bf16.msra.mxu0 0
    %227 = vmatprep.subr.bf16.mxu0 0
    %228 = vmatpush1.bf16.msra.mxu0 0
    %229 = vmatprep.subr.bf16.mxu0 0
    %230 = vmatpush1.bf16.msra.mxu0 0
    %231 = vmatprep.subr.bf16.mxu0 0
    %232 = vmatpush1.bf16.msra.mxu0 0
    %233 = vmatprep.subr.bf16.mxu0 0
    %234 = vmatpush1.bf16.msra.mxu0 0
    %235 = vmatprep.subr.bf16.mxu0 0
    %236 = vmatpush1.bf16.msra.mxu0 0
    %237 = vmatprep.subr.bf16.mxu0 0
    %238 = vmatpush1.bf16.msra.mxu0 0
    %239 = vmatprep.subr.bf16.mxu0 0
    %240 = vmatpush1.bf16.msra.mxu0 0
    %241 = vmatprep.subr.bf16.mxu0 0
    %242 = vmatpush1.bf16.msra.mxu0 0
    %243 = vmatprep.subr.bf16.mxu0 0
    %244 = vmatpush1.bf16.msra.mxu0 0
    %245 = vmatprep.mubr.bf16.mxu0 0
    %246 = vmatmul.mubr.bf16.gmra.mrb[0].mxu0 %v170
    %v247 = vpop.f32.mrb[0].mxu0
    %v248 = vadd.f32 %v100, %v247
    %v249 = vpop.f32.mrb[0].mxu0
    %v250 = vpop.f32.mrb[0].mxu0
    %v251 = vpop.f32.mrb[0].mxu0
    %252 = vdwg.mxu0
    %v253 = vmax.f32 %v207, 0.0
    %v254 = vmax.f32 %v209, 0.0
    %v255 = vmax.f32 %v248, 0.0
    %v256 = vpack.c.bf16 %v253, %v253
    %v257 = vpack.c.bf16 %v254, %v254
    %v258 = vpack.c.bf16 %v255, %v255
    %v259 = vld [vmem:[#allocation5] sm:$0xff]
    %v260 = vld [vmem:[#allocation5 + $0x8] sm:$0xf]
    %v261 = vld [vmem:[#allocation5 + $0xc] sm:$0xff]
    %v262 = vld [vmem:[#allocation5 + $0x14] sm:$0xf]
    %v263 = vld [vmem:[#allocation5 + $0x18] sm:$0xff]
    %v264 = vld [vmem:[#allocation5 + $0x20] sm:$0xf]
    %v265 = vld [vmem:[#allocation5 + $0x24] sm:$0xff]
    %v266 = vld [vmem:[#allocation5 + $0x2c] sm:$0xf]
    %v267 = vld [vmem:[#allocation5 + $0x30] sm:$0xff]
    %v268 = vld [vmem:[#allocation5 + $0x38] sm:$0xf]
    %v269 = vld [vmem:[#allocation5 + $0x3c] sm:$0xff]
    %v270 = vld [vmem:[#allocation5 + $0x44] sm:$0xf]
    %v271 = vld [vmem:[#allocation5 + $0x48] sm:$0xff]
    %v272 = vld [vmem:[#allocation5 + $0x50] sm:$0xf]
    %v273 = vld [vmem:[#allocation5 + $0x54] sm:$0xff]
    %v274 = vld [vmem:[#allocation5 + $0x5c] sm:$0xf]
    %v275 = vld [vmem:[#allocation5 + $0x60] sm:$0xff]
    %v276 = vld [vmem:[#allocation5 + $0x68] sm:$0xf]
    %v277 = vld [vmem:[#allocation5 + $0x6c] sm:$0xff]
    %v278 = vld [vmem:[#allocation5 + $0x74] sm:$0xf]
    %v279 = vld [vmem:[#allocation5 + $0x78] sm:$0xff]
    %v280 = vld [vmem:[#allocation5 + $0x80] sm:$0xf]
    %v281 = vld [vmem:[#allocation5 + $0x84] sm:$0xff]
    %v282 = vld [vmem:[#allocation5 + $0x8c] sm:$0xf]
    %v283 = vld [vmem:[#allocation5 + $0x90] sm:$0xff]
    %v284 = vld [vmem:[#allocation5 + $0x98] sm:$0xf]
    %v285 = vld [vmem:[#allocation5 + $0x9c] sm:$0xff]
    %v286 = vld [vmem:[#allocation5 + $0xa4] sm:$0xf]
    %v287 = vld [vmem:[#allocation5 + $0xa8] sm:$0xff]
    %v288 = vld [vmem:[#allocation5 + $0xb0] sm:$0xf]
    %v289 = vld [vmem:[#allocation5 + $0xb4] sm:$0xff]
    %v290 = vld [vmem:[#allocation5 + $0xbc] sm:$0xf]
    %v291 = vld [vmem:[#allocation5 + $0xc0] sm:$0xff]
    %v292 = vld [vmem:[#allocation5 + $0xc8] sm:$0xf]
    %v293 = vld [vmem:[#allocation5 + $0xcc] sm:$0xff]
    %v294 = vld [vmem:[#allocation5 + $0xd4] sm:$0xf]
    %v295 = vld [vmem:[#allocation5 + $0xd8] sm:$0xff]
    %v296 = vld [vmem:[#allocation5 + $0xe0] sm:$0xf]
    %v297 = vld [vmem:[#allocation5 + $0xe4] sm:$0xff]
    %v298 = vld [vmem:[#allocation5 + $0xec] sm:$0xf]
    %v299 = vld [vmem:[#allocation5 + $0xf0] sm:$0xff]
    %v300 = vld [vmem:[#allocation5 + $0xf8] sm:$0xf]
    %v301 = vld [vmem:[#allocation5 + $0xfc] sm:$0xff]
    %v302 = vld [vmem:[#allocation5 + $0x104] sm:$0xf]
    %v303 = vld [vmem:[#allocation5 + $0x108] sm:$0xff]
    %v304 = vld [vmem:[#allocation5 + $0x110] sm:$0xf]
    %v305 = vld [vmem:[#allocation5 + $0x114] sm:$0xff]
    %v306 = vld [vmem:[#allocation5 + $0x11c] sm:$0xf]
    %v307 = vld [vmem:[#allocation5 + $0x120] sm:$0xff]
    %v308 = vld [vmem:[#allocation5 + $0x128] sm:$0xf]
    %v309 = vld [vmem:[#allocation5 + $0x12c] sm:$0xff]
    %v310 = vld [vmem:[#allocation5 + $0x134] sm:$0xf]
    %v311 = vld [vmem:[#allocation5 + $0x138] sm:$0xff]
    %v312 = vld [vmem:[#allocation5 + $0x140] sm:$0xf]
    %v313 = vld [vmem:[#allocation5 + $0x144] sm:$0xff]
    %v314 = vld [vmem:[#allocation5 + $0x14c] sm:$0xf]
    %v315 = vld [vmem:[#allocation5 + $0x150] sm:$0xff]
    %v316 = vld [vmem:[#allocation5 + $0x158] sm:$0xf]
    %v317 = vld [vmem:[#allocation5 + $0x15c] sm:$0xff]
    %v318 = vld [vmem:[#allocation5 + $0x164] sm:$0xf]
    %v319 = vld [vmem:[#allocation5 + $0x168] sm:$0xff]
    %v320 = vld [vmem:[#allocation5 + $0x170] sm:$0xf]
    %v321 = vld [vmem:[#allocation5 + $0x174] sm:$0xff]
    %v322 = vld [vmem:[#allocation5 + $0x17c] sm:$0xf]
    %v323 = vld [vmem:[#allocation5 + $0x180] sm:$0xff]
    %v324 = vld [vmem:[#allocation5 + $0x188] sm:$0xf]
    %v325 = vld [vmem:[#allocation5 + $0x18c] sm:$0xff]
    %v326 = vld [vmem:[#allocation5 + $0x194] sm:$0xf]
    %v327 = vld [vmem:[#allocation5 + $0x198] sm:$0xff]
    %v328 = vld [vmem:[#allocation5 + $0x1a0] sm:$0xf]
    %v329 = vld [vmem:[#allocation5 + $0x1a4] sm:$0xff]
    %v330 = vld [vmem:[#allocation5 + $0x1ac] sm:$0xf]
    %v331 = vld [vmem:[#allocation5 + $0x1b0] sm:$0xff]
    %v332 = vld [vmem:[#allocation5 + $0x1b8] sm:$0xf]
    %v333 = vld [vmem:[#allocation5 + $0x1bc] sm:$0xff]
    %v334 = vld [vmem:[#allocation5 + $0x1c4] sm:$0xf]
    %v335 = vld [vmem:[#allocation5 + $0x1c8] sm:$0xff]
    %v336 = vld [vmem:[#allocation5 + $0x1d0] sm:$0xf]
    %v337 = vld [vmem:[#allocation5 + $0x1d4] sm:$0xff]
    %v338 = vld [vmem:[#allocation5 + $0x1dc] sm:$0xf]
    %v339 = vld [vmem:[#allocation5 + $0x1e0] sm:$0xff]
    %v340 = vld [vmem:[#allocation5 + $0x1e8] sm:$0xf]
    %v341 = vld [vmem:[#allocation5 + $0x1ec] sm:$0xff]
    %v342 = vld [vmem:[#allocation5 + $0x1f4] sm:$0xf]
    %v343 = vld [vmem:[#allocation5 + $0x1f8] sm:$0xff]
    %v344 = vld [vmem:[#allocation5 + $0x200] sm:$0xf]
    %v345 = vld [vmem:[#allocation5 + $0x204] sm:$0xff]
    %v346 = vld [vmem:[#allocation5 + $0x20c] sm:$0xf]
    %v347 = vld [vmem:[#allocation5 + $0x210] sm:$0xff]
    %v348 = vld [vmem:[#allocation5 + $0x218] sm:$0xf]
    %v349 = vld [vmem:[#allocation5 + $0x21c] sm:$0xff]
    %v350 = vld [vmem:[#allocation5 + $0x224] sm:$0xf]
    %v351 = vld [vmem:[#allocation5 + $0x228] sm:$0xff]
    %v352 = vld [vmem:[#allocation5 + $0x230] sm:$0xf]
    %v353 = vld [vmem:[#allocation5 + $0x234] sm:$0xff]
    %v354 = vld [vmem:[#allocation5 + $0x23c] sm:$0xf]
    %v355 = vld [vmem:[%s4] sm:$0x7]
    %v357 = vlaneseq
    %v358 = vshrl.u32 %v357, 7
    %v359 = vsub.s32 0, %v358
    %v360 = vrot.slane %v355, %v359
    %v361 = vlaneseq
    %v362 = vshrl.u32 %v361, 7
    %v363 = vsub.s32 1, %v362
    %v364 = vrot.slane %v355, %v363
    %v365 = vlaneseq
    %v366 = vshrl.u32 %v365, 7
    %v367 = vsub.s32 2, %v366
    %v368 = vrot.slane %v355, %v367
    %v468 = vunpack.c.l.b16 %v259
    %v469 = vunpack.c.h.b16 %v259
    %v470 = vunpack.c.l.b16 %v260
    %v471 = vunpack.c.l.b16 %v261
    %v472 = vunpack.c.h.b16 %v261
    %v473 = vunpack.c.l.b16 %v262
    %v474 = vunpack.c.l.b16 %v263
    %v475 = vunpack.c.h.b16 %v263
    %v476 = vunpack.c.l.b16 %v264
    %v477 = vunpack.c.l.b16 %v265
    %v478 = vunpack.c.h.b16 %v265
    %v479 = vunpack.c.l.b16 %v266
    %v480 = vunpack.c.l.b16 %v267
    %v481 = vunpack.c.h.b16 %v267
    %v482 = vunpack.c.l.b16 %v268
    %v483 = vunpack.c.l.b16 %v269
    %v484 = vunpack.c.h.b16 %v269
    %v485 = vunpack.c.l.b16 %v270
    %v486 = vunpack.c.l.b16 %v271
    %v487 = vunpack.c.h.b16 %v271
    %v488 = vunpack.c.l.b16 %v272
    %v489 = vunpack.c.l.b16 %v273
    %v490 = vunpack.c.h.b16 %v273
    %v491 = vunpack.c.l.b16 %v274
    %v492 = vunpack.c.l.b16 %v275
    %v493 = vunpack.c.h.b16 %v275
    %v494 = vunpack.c.l.b16 %v276
    %v495 = vunpack.c.l.b16 %v277
    %v496 = vunpack.c.h.b16 %v277
    %v497 = vunpack.c.l.b16 %v278
    %v498 = vunpack.c.l.b16 %v279
    %v499 = vunpack.c.h.b16 %v279
    %v500 = vunpack.c.l.b16 %v280
    %v501 = vunpack.c.l.b16 %v281
    %v502 = vunpack.c.h.b16 %v281
    %v503 = vunpack.c.l.b16 %v282
    %v504 = vunpack.c.l.b16 %v283
    %v505 = vunpack.c.h.b16 %v283
    %v506 = vunpack.c.l.b16 %v284
    %v507 = vunpack.c.l.b16 %v285
    %v508 = vunpack.c.h.b16 %v285
    %v509 = vunpack.c.l.b16 %v286
    %v510 = vunpack.c.l.b16 %v287
    %v511 = vunpack.c.h.b16 %v287
    %v512 = vunpack.c.l.b16 %v288
    %v513 = vunpack.c.l.b16 %v289
    %v514 = vunpack.c.h.b16 %v289
    %v515 = vunpack.c.l.b16 %v290
    %v516 = vunpack.c.l.b16 %v291
    %v517 = vunpack.c.h.b16 %v291
    %v518 = vunpack.c.l.b16 %v292
    %v519 = vunpack.c.l.b16 %v293
    %v520 = vunpack.c.h.b16 %v293
    %v521 = vunpack.c.l.b16 %v294
    %v522 = vunpack.c.l.b16 %v295
    %v523 = vunpack.c.h.b16 %v295
    %v524 = vunpack.c.l.b16 %v296
    %v525 = vunpack.c.l.b16 %v297
    %v526 = vunpack.c.h.b16 %v297
    %v527 = vunpack.c.l.b16 %v298
    %v528 = vunpack.c.l.b16 %v299
    %v529 = vunpack.c.h.b16 %v299
    %v530 = vunpack.c.l.b16 %v300
    %v531 = vunpack.c.l.b16 %v301
    %v532 = vunpack.c.h.b16 %v301
    %v533 = vunpack.c.l.b16 %v302
    %v534 = vunpack.c.l.b16 %v303
    %v535 = vunpack.c.h.b16 %v303
    %v536 = vunpack.c.l.b16 %v304
    %v537 = vunpack.c.l.b16 %v305
    %v538 = vunpack.c.h.b16 %v305
    %v539 = vunpack.c.l.b16 %v306
    %v540 = vunpack.c.l.b16 %v307
    %v541 = vunpack.c.h.b16 %v307
    %v542 = vunpack.c.l.b16 %v308
    %v543 = vunpack.c.l.b16 %v309
    %v544 = vunpack.c.h.b16 %v309
    %v545 = vunpack.c.l.b16 %v310
    %v546 = vunpack.c.l.b16 %v311
    %v547 = vunpack.c.h.b16 %v311
    %v548 = vunpack.c.l.b16 %v312
    %v549 = vunpack.c.l.b16 %v313
    %v550 = vunpack.c.h.b16 %v313
    %v551 = vunpack.c.l.b16 %v314
    %v552 = vunpack.c.l.b16 %v315
    %v553 = vunpack.c.h.b16 %v315
    %v554 = vunpack.c.l.b16 %v316
    %v555 = vunpack.c.l.b16 %v317
    %v556 = vunpack.c.h.b16 %v317
    %v557 = vunpack.c.l.b16 %v318
    %v558 = vunpack.c.l.b16 %v319
    %v559 = vunpack.c.h.b16 %v319
    %v560 = vunpack.c.l.b16 %v320
    %v561 = vunpack.c.l.b16 %v321
    %v562 = vunpack.c.h.b16 %v321
    %v563 = vunpack.c.l.b16 %v322
    %v564 = vunpack.c.l.b16 %v323
    %v565 = vunpack.c.h.b16 %v323
    %v566 = vunpack.c.l.b16 %v324
    %v567 = vunpack.c.l.b16 %v325
    %v568 = vunpack.c.h.b16 %v325
    %v569 = vunpack.c.l.b16 %v326
    %v570 = vunpack.c.l.b16 %v327
    %v571 = vunpack.c.h.b16 %v327
    %v572 = vunpack.c.l.b16 %v328
    %v573 = vunpack.c.l.b16 %v329
    %v574 = vunpack.c.h.b16 %v329
    %v575 = vunpack.c.l.b16 %v330
    %v576 = vunpack.c.l.b16 %v331
    %v577 = vunpack.c.h.b16 %v331
    %v578 = vunpack.c.l.b16 %v332
    %v579 = vunpack.c.l.b16 %v333
    %v580 = vunpack.c.h.b16 %v333
    %v581 = vunpack.c.l.b16 %v334
    %v582 = vunpack.c.l.b16 %v335
    %v583 = vunpack.c.h.b16 %v335
    %v584 = vunpack.c.l.b16 %v336
    %v585 = vunpack.c.l.b16 %v337
    %v586 = vunpack.c.h.b16 %v337
    %v587 = vunpack.c.l.b16 %v338
    %v588 = vunpack.c.l.b16 %v339
    %v589 = vunpack.c.h.b16 %v339
    %v590 = vunpack.c.l.b16 %v340
    %v591 = vunpack.c.l.b16 %v341
    %v592 = vunpack.c.h.b16 %v341
    %v593 = vunpack.c.l.b16 %v342
    %v594 = vunpack.c.l.b16 %v343
    %v595 = vunpack.c.h.b16 %v343
    %v596 = vunpack.c.l.b16 %v344
    %v597 = vunpack.c.l.b16 %v345
    %v598 = vunpack.c.h.b16 %v345
    %v599 = vunpack.c.l.b16 %v346
    %v600 = vunpack.c.l.b16 %v347
    %v601 = vunpack.c.h.b16 %v347
    %v602 = vunpack.c.l.b16 %v348
    %v603 = vunpack.c.l.b16 %v349
    %v604 = vunpack.c.h.b16 %v349
    %v605 = vunpack.c.l.b16 %v350
    %v606 = vunpack.c.l.b16 %v351
    %v607 = vunpack.c.h.b16 %v351
    %v608 = vunpack.c.l.b16 %v352
    %v609 = vunpack.c.l.b16 %v353
    %v610 = vunpack.c.h.b16 %v353
    %v611 = vunpack.c.l.b16 %v354
    %v612 = vpack.c.b16 %v471, %v468
    %v613 = vpack.c.b16 %v472, %v469
    %v614 = vpack.c.b16 %v473, %v470
    %v615 = vpack.c.b16 %v477, %v474
    %v616 = vpack.c.b16 %v478, %v475
    %v617 = vpack.c.b16 %v479, %v476
    %v618 = vpack.c.b16 %v483, %v480
    %v619 = vpack.c.b16 %v484, %v481
    %v620 = vpack.c.b16 %v485, %v482
    %v621 = vpack.c.b16 %v489, %v486
    %v622 = vpack.c.b16 %v490, %v487
    %v623 = vpack.c.b16 %v491, %v488
    %v624 = vpack.c.b16 %v495, %v492
    %v625 = vpack.c.b16 %v496, %v493
    %v626 = vpack.c.b16 %v497, %v494
    %v627 = vpack.c.b16 %v501, %v498
    %v628 = vpack.c.b16 %v502, %v499
    %v629 = vpack.c.b16 %v503, %v500
    %v630 = vpack.c.b16 %v507, %v504
    %v631 = vpack.c.b16 %v508, %v505
    %v632 = vpack.c.b16 %v509, %v506
    %v633 = vpack.c.b16 %v513, %v510
    %v634 = vpack.c.b16 %v514, %v511
    %v635 = vpack.c.b16 %v515, %v512
    %v636 = vpack.c.b16 %v519, %v516
    %v637 = vpack.c.b16 %v520, %v517
    %v638 = vpack.c.b16 %v521, %v518
    %v639 = vpack.c.b16 %v525, %v522
    %v640 = vpack.c.b16 %v526, %v523
    %v641 = vpack.c.b16 %v527, %v524
    %v642 = vpack.c.b16 %v531, %v528
    %v643 = vpack.c.b16 %v532, %v529
    %v644 = vpack.c.b16 %v533, %v530
    %v645 = vpack.c.b16 %v537, %v534
    %v646 = vpack.c.b16 %v538, %v535
    %v647 = vpack.c.b16 %v539, %v536
    %v648 = vpack.c.b16 %v543, %v540
    %v649 = vpack.c.b16 %v544, %v541
    %v650 = vpack.c.b16 %v545, %v542
    %v651 = vpack.c.b16 %v549, %v546
    %v652 = vpack.c.b16 %v550, %v547
    %v653 = vpack.c.b16 %v551, %v548
    %v654 = vpack.c.b16 %v555, %v552
    %v655 = vpack.c.b16 %v556, %v553
    %v656 = vpack.c.b16 %v557, %v554
    %v657 = vpack.c.b16 %v561, %v558
    %v658 = vpack.c.b16 %v562, %v559
    %v659 = vpack.c.b16 %v563, %v560
    %v660 = vpack.c.b16 %v567, %v564
    %v661 = vpack.c.b16 %v568, %v565
    %v662 = vpack.c.b16 %v569, %v566
    %v663 = vpack.c.b16 %v573, %v570
    %v664 = vpack.c.b16 %v574, %v571
    %v665 = vpack.c.b16 %v575, %v572
    %v666 = vpack.c.b16 %v579, %v576
    %v667 = vpack.c.b16 %v580, %v577
    %v668 = vpack.c.b16 %v581, %v578
    %v669 = vpack.c.b16 %v585, %v582
    %v670 = vpack.c.b16 %v586, %v583
    %v671 = vpack.c.b16 %v587, %v584
    %v672 = vpack.c.b16 %v591, %v588
    %v673 = vpack.c.b16 %v592, %v589
    %v674 = vpack.c.b16 %v593, %v590
    %v675 = vpack.c.b16 %v597, %v594
    %v676 = vpack.c.b16 %v598, %v595
    %v677 = vpack.c.b16 %v599, %v596
    %v678 = vpack.c.b16 %v603, %v600
    %v679 = vpack.c.b16 %v604, %v601
    %v680 = vpack.c.b16 %v605, %v602
    %v681 = vpack.c.b16 %v609, %v606
    %v682 = vpack.c.b16 %v610, %v607
    %v683 = vpack.c.b16 %v611, %v608
    %756 = vmatprep.subr.bf16.mxu0 %v613
    %757 = vmatpush1.bf16.msra.mxu0 %v612
    %758 = vmatprep.subr.bf16.mxu0 %v616
    %759 = vmatpush1.bf16.msra.mxu0 %v615
    %760 = vmatprep.subr.bf16.mxu0 %v619
    %761 = vmatpush1.bf16.msra.mxu0 %v618
    %762 = vmatprep.subr.bf16.mxu0 %v622
    %763 = vmatpush1.bf16.msra.mxu0 %v621
    %764 = vmatprep.subr.bf16.mxu0 %v625
    %765 = vmatpush1.bf16.msra.mxu0 %v624
    %766 = vmatprep.subr.bf16.mxu0 %v628
    %767 = vmatpush1.bf16.msra.mxu0 %v627
    %768 = vmatprep.subr.bf16.mxu0 %v631
    %769 = vmatpush1.bf16.msra.mxu0 %v630
    %770 = vmatprep.subr.bf16.mxu0 %v634
    %771 = vmatpush1.bf16.msra.mxu0 %v633
    %772 = vmatprep.subr.bf16.mxu0 %v637
    %773 = vmatpush1.bf16.msra.mxu0 %v636
    %774 = vmatprep.subr.bf16.mxu0 %v640
    %775 = vmatpush1.bf16.msra.mxu0 %v639
    %776 = vmatprep.subr.bf16.mxu0 %v643
    %777 = vmatpush1.bf16.msra.mxu0 %v642
    %778 = vmatprep.subr.bf16.mxu0 %v646
    %779 = vmatpush1.bf16.msra.mxu0 %v645
    %780 = vmatprep.subr.bf16.mxu0 %v649
    %781 = vmatpush1.bf16.msra.mxu0 %v648
    %782 = vmatprep.subr.bf16.mxu0 %v652
    %783 = vmatpush1.bf16.msra.mxu0 %v651
    %784 = vmatprep.subr.bf16.mxu0 %v655
    %785 = vmatpush1.bf16.msra.mxu0 %v654
    %786 = vmatprep.subr.bf16.mxu0 %v658
    %787 = vmatpush1.bf16.msra.mxu0 %v657
    %788 = vmatprep.mubr.bf16.mxu0 %v257
    %789 = vmatmul.mubr.bf16.gmra.mrb[0].mxu0 %v256
    %v790 = vpop.f32.mrb[0].mxu0
    %v791 = vadd.f32 %v360, %v790
    %v792 = vpop.f32.mrb[0].mxu0
    %v793 = vadd.f32 %v364, %v792
    %v794 = vpop.f32.mrb[0].mxu0
    %v795 = vpop.f32.mrb[0].mxu0
    %796 = vdwg.mxu0
    %797 = vmatprep.subr.bf16.mxu0 %v661
    %798 = vmatpush1.bf16.msra.mxu0 %v660
    %799 = vmatprep.subr.bf16.mxu0 %v664
    %800 = vmatpush1.bf16.msra.mxu0 %v663
    %801 = vmatprep.subr.bf16.mxu0 %v667
    %802 = vmatpush1.bf16.msra.mxu0 %v666
    %803 = vmatprep.subr.bf16.mxu0 %v670
    %804 = vmatpush1.bf16.msra.mxu0 %v669
    %805 = vmatprep.subr.bf16.mxu0 %v673
    %806 = vmatpush1.bf16.msra.mxu0 %v672
    %807 = vmatprep.subr.bf16.mxu0 %v676
    %808 = vmatpush1.bf16.msra.mxu0 %v675
    %809 = vmatprep.subr.bf16.mxu0 %v679
    %810 = vmatpush1.bf16.msra.mxu0 %v678
    %811 = vmatprep.subr.bf16.mxu0 %v682
    %812 = vmatpush1.bf16.msra.mxu0 %v681
    %813 = vmatprep.subr.bf16.mxu0 0
    %814 = vmatpush1.bf16.msra.mxu0 0
    %815 = vmatprep.subr.bf16.mxu0 0
    %816 = vmatpush1.bf16.msra.mxu0 0
    %817 = vmatprep.subr.bf16.mxu0 0
    %818 = vmatpush1.bf16.msra.mxu0 0
    %819 = vmatprep.subr.bf16.mxu0 0
    %820 = vmatpush1.bf16.msra.mxu0 0
    %821 = vmatprep.subr.bf16.mxu0 0
    %822 = vmatpush1.bf16.msra.mxu0 0
    %823 = vmatprep.subr.bf16.mxu0 0
    %824 = vmatpush1.bf16.msra.mxu0 0
    %825 = vmatprep.subr.bf16.mxu0 0
    %826 = vmatpush1.bf16.msra.mxu0 0
    %827 = vmatprep.subr.bf16.mxu0 0
    %828 = vmatpush1.bf16.msra.mxu0 0
    %829 = vmatprep.mubr.bf16.mxu0 0
    %830 = vmatmul.mubr.bf16.gmra.mrb[0].mxu0 %v258
    %v831 = vpop.f32.mrb[0].mxu0
    %v832 = vadd.f32 %v791, %v831
    %v833 = vpop.f32.mrb[0].mxu0
    %v834 = vadd.f32 %v793, %v833
    %v835 = vpop.f32.mrb[0].mxu0
    %v836 = vpop.f32.mrb[0].mxu0
    %837 = vdwg.mxu0
    %838 = vmatprep.subr.bf16.mxu0 0
    %839 = vmatpush1.bf16.msra.mxu0 %v614
    %840 = vmatprep.subr.bf16.mxu0 0
    %841 = vmatpush1.bf16.msra.mxu0 %v617
    %842 = vmatprep.subr.bf16.mxu0 0
    %843 = vmatpush1.bf16.msra.mxu0 %v620
    %844 = vmatprep.subr.bf16.mxu0 0
    %845 = vmatpush1.bf16.msra.mxu0 %v623
    %846 = vmatprep.subr.bf16.mxu0 0
    %847 = vmatpush1.bf16.msra.mxu0 %v626
    %848 = vmatprep.subr.bf16.mxu0 0
    %849 = vmatpush1.bf16.msra.mxu0 %v629
    %850 = vmatprep.subr.bf16.mxu0 0
    %851 = vmatpush1.bf16.msra.mxu0 %v632
    %852 = vmatprep.subr.bf16.mxu0 0
    %853 = vmatpush1.bf16.msra.mxu0 %v635
    %854 = vmatprep.subr.bf16.mxu0 0
    %855 = vmatpush1.bf16.msra.mxu0 %v638
    %856 = vmatprep.subr.bf16.mxu0 0
    %857 = vmatpush1.bf16.msra.mxu0 %v641
    %858 = vmatprep.subr.bf16.mxu0 0
    %859 = vmatpush1.bf16.msra.mxu0 %v644
    %860 = vmatprep.subr.bf16.mxu0 0
    %861 = vmatpush1.bf16.msra.mxu0 %v647
    %862 = vmatprep.subr.bf16.mxu0 0
    %863 = vmatpush1.bf16.msra.mxu0 %v650
    %864 = vmatprep.subr.bf16.mxu0 0
    %865 = vmatpush1.bf16.msra.mxu0 %v653
    %866 = vmatprep.subr.bf16.mxu0 0
    %867 = vmatpush1.bf16.msra.mxu0 %v656
    %868 = vmatprep.subr.bf16.mxu0 0
    %869 = vmatpush1.bf16.msra.mxu0 %v659
    %870 = vmatprep.mubr.bf16.mxu0 %v257
    %871 = vmatmul.mubr.bf16.gmra.mrb[0].mxu0 %v256
    %v872 = vpop.f32.mrb[0].mxu0
    %v873 = vadd.f32 %v368, %v872
    %v874 = vpop.f32.mrb[0].mxu0
    %v875 = vpop.f32.mrb[0].mxu0
    %v876 = vpop.f32.mrb[0].mxu0
    %877 = vdwg.mxu0
    %878 = vmatprep.subr.bf16.mxu0 0
    %879 = vmatpush1.bf16.msra.mxu0 %v662
    %880 = vmatprep.subr.bf16.mxu0 0
    %881 = vmatpush1.bf16.msra.mxu0 %v665
    %882 = vmatprep.subr.bf16.mxu0 0
    %883 = vmatpush1.bf16.msra.mxu0 %v668
    %884 = vmatprep.subr.bf16.mxu0 0
    %885 = vmatpush1.bf16.msra.mxu0 %v671
    %886 = vmatprep.subr.bf16.mxu0 0
    %887 = vmatpush1.bf16.msra.mxu0 %v674
    %888 = vmatprep.subr.bf16.mxu0 0
    %889 = vmatpush1.bf16.msra.mxu0 %v677
    %890 = vmatprep.subr.bf16.mxu0 0
    %891 = vmatpush1.bf16.msra.mxu0 %v680
    %892 = vmatprep.subr.bf16.mxu0 0
    %893 = vmatpush1.bf16.msra.mxu0 %v683
    %894 = vmatprep.subr.bf16.mxu0 0
    %895 = vmatpush1.bf16.msra.mxu0 0
    %896 = vmatprep.subr.bf16.mxu0 0
    %897 = vmatpush1.bf16.msra.mxu0 0
    %898 = vmatprep.subr.bf16.mxu0 0
    %899 = vmatpush1.bf16.msra.mxu0 0
    %900 = vmatprep.subr.bf16.mxu0 0
    %901 = vmatpush1.bf16.msra.mxu0 0
    %902 = vmatprep.subr.bf16.mxu0 0
    %903 = vmatpush1.bf16.msra.mxu0 0
    %904 = vmatprep.subr.bf16.mxu0 0
    %905 = vmatpush1.bf16.msra.mxu0 0
    %906 = vmatprep.subr.bf16.mxu0 0
    %907 = vmatpush1.bf16.msra.mxu0 0
    %908 = vmatprep.subr.bf16.mxu0 0
    %909 = vmatpush1.bf16.msra.mxu0 0
    %910 = vmatprep.mubr.bf16.mxu0 0
    %911 = vmatmul.mubr.bf16.gmra.mrb[0].mxu0 %v258
    %v912 = vpop.f32.mrb[0].mxu0
    %v913 = vadd.f32 %v873, %v912
    %v914 = vpop.f32.mrb[0].mxu0
    %v915 = vpop.f32.mrb[0].mxu0
    %v916 = vpop.f32.mrb[0].mxu0
    %917 = vdwg.mxu0
    %v918 = vmax.f32 %v832, 0.0
    %v919 = vmax.f32 %v834, 0.0
    %v920 = vmax.f32 %v913, 0.0
    %v921 = vpack.c.bf16 %v918, %v918
    %v922 = vpack.c.bf16 %v919, %v919
    %v923 = vpack.c.bf16 %v920, %v920
    %v924 = vld [vmem:[#allocation7] sm:$0xf]
    %v925 = vld [vmem:[#allocation7 + $0x4] sm:$0xf]
    %v926 = vld [vmem:[#allocation7 + $0x8] sm:$0xf]
    %v927 = vld [vmem:[#allocation7 + $0xc] sm:$0xf]
    %v928 = vld [vmem:[#allocation7 + $0x10] sm:$0xf]
    %v929 = vld [vmem:[#allocation7 + $0x14] sm:$0xf]
    %v930 = vld [vmem:[#allocation7 + $0x18] sm:$0xf]
    %v931 = vld [vmem:[#allocation7 + $0x1c] sm:$0xf]
    %v932 = vld [vmem:[#allocation7 + $0x20] sm:$0xf]
    %v933 = vld [vmem:[#allocation7 + $0x24] sm:$0xf]
    %v934 = vld [vmem:[#allocation7 + $0x28] sm:$0xf]
    %v935 = vld [vmem:[#allocation7 + $0x2c] sm:$0xf]
    %v936 = vld [vmem:[#allocation7 + $0x30] sm:$0xf]
    %v937 = vld [vmem:[#allocation7 + $0x34] sm:$0xf]
    %v938 = vld [vmem:[#allocation7 + $0x38] sm:$0xf]
    %v939 = vld [vmem:[#allocation7 + $0x3c] sm:$0xf]
    %v940 = vld [vmem:[#allocation7 + $0x40] sm:$0xf]
    %v941 = vld [vmem:[#allocation7 + $0x44] sm:$0xf]
    %v942 = vld [vmem:[#allocation7 + $0x48] sm:$0xf]
    %v943 = vld [vmem:[#allocation7 + $0x4c] sm:$0xf]
    %v944 = vld [vmem:[#allocation7 + $0x50] sm:$0xf]
    %v945 = vld [vmem:[#allocation7 + $0x54] sm:$0xf]
    %v946 = vld [vmem:[#allocation7 + $0x58] sm:$0xf]
    %v947 = vld [vmem:[#allocation7 + $0x5c] sm:$0xf]
    %v948 = vld [vmem:[#allocation7 + $0x60] sm:$0xf]
    %v949 = vld [vmem:[#allocation7 + $0x64] sm:$0xf]
    %v950 = vld [vmem:[#allocation7 + $0x68] sm:$0xf]
    %v951 = vld [vmem:[#allocation7 + $0x6c] sm:$0xf]
    %v952 = vld [vmem:[#allocation7 + $0x70] sm:$0xf]
    %v953 = vld [vmem:[#allocation7 + $0x74] sm:$0xf]
    %v954 = vld [vmem:[#allocation7 + $0x78] sm:$0xf]
    %v955 = vld [vmem:[#allocation7 + $0x7c] sm:$0xf]
    %v956 = vld [vmem:[#allocation7 + $0x80] sm:$0xf]
    %v957 = vld [vmem:[#allocation7 + $0x84] sm:$0xf]
    %v958 = vld [vmem:[#allocation7 + $0x88] sm:$0xf]
    %v959 = vld [vmem:[#allocation7 + $0x8c] sm:$0xf]
    %v960 = vld [vmem:[#allocation7 + $0x90] sm:$0xf]
    %v961 = vld [vmem:[#allocation7 + $0x94] sm:$0xf]
    %v962 = vld [vmem:[#allocation7 + $0x98] sm:$0xf]
    %v963 = vld [vmem:[#allocation7 + $0x9c] sm:$0xf]
    %v964 = vld [vmem:[#allocation7 + $0xa0] sm:$0xf]
    %v965 = vld [vmem:[#allocation7 + $0xa4] sm:$0xf]
    %v966 = vld [vmem:[#allocation7 + $0xa8] sm:$0xf]
    %v967 = vld [vmem:[#allocation7 + $0xac] sm:$0xf]
    %v968 = vld [vmem:[#allocation7 + $0xb0] sm:$0xf]
    %v969 = vld [vmem:[#allocation7 + $0xb4] sm:$0xf]
    %v970 = vld [vmem:[#allocation7 + $0xb8] sm:$0xf]
    %v971 = vld [vmem:[#allocation7 + $0xbc] sm:$0xf]
    %v972 = vld [vmem:[%s6] sm:$0x1]
    %v974 = vlaneseq
    %v975 = vshrl.u32 %v974, 7
    %v976 = vsub.s32 0, %v975
    %v977 = vrot.slane %v972, %v976
    %v1027 = vunpack.c.l.b16 %v924
    %v1028 = vunpack.c.l.b16 %v925
    %v1029 = vunpack.c.l.b16 %v926
    %v1030 = vunpack.c.l.b16 %v927
    %v1031 = vunpack.c.l.b16 %v928
    %v1032 = vunpack.c.l.b16 %v929
    %v1033 = vunpack.c.l.b16 %v930
    %v1034 = vunpack.c.l.b16 %v931
    %v1035 = vunpack.c.l.b16 %v932
    %v1036 = vunpack.c.l.b16 %v933
    %v1037 = vunpack.c.l.b16 %v934
    %v1038 = vunpack.c.l.b16 %v935
    %v1039 = vunpack.c.l.b16 %v936
    %v1040 = vunpack.c.l.b16 %v937
    %v1041 = vunpack.c.l.b16 %v938
    %v1042 = vunpack.c.l.b16 %v939
    %v1043 = vunpack.c.l.b16 %v940
    %v1044 = vunpack.c.l.b16 %v941
    %v1045 = vunpack.c.l.b16 %v942
    %v1046 = vunpack.c.l.b16 %v943
    %v1047 = vunpack.c.l.b16 %v944
    %v1048 = vunpack.c.l.b16 %v945
    %v1049 = vunpack.c.l.b16 %v946
    %v1050 = vunpack.c.l.b16 %v947
    %v1051 = vunpack.c.l.b16 %v948
    %v1052 = vunpack.c.l.b16 %v949
    %v1053 = vunpack.c.l.b16 %v950
    %v1054 = vunpack.c.l.b16 %v951
    %v1055 = vunpack.c.l.b16 %v952
    %v1056 = vunpack.c.l.b16 %v953
    %v1057 = vunpack.c.l.b16 %v954
    %v1058 = vunpack.c.l.b16 %v955
    %v1059 = vunpack.c.l.b16 %v956
    %v1060 = vunpack.c.l.b16 %v957
    %v1061 = vunpack.c.l.b16 %v958
    %v1062 = vunpack.c.l.b16 %v959
    %v1063 = vunpack.c.l.b16 %v960
    %v1064 = vunpack.c.l.b16 %v961
    %v1065 = vunpack.c.l.b16 %v962
    %v1066 = vunpack.c.l.b16 %v963
    %v1067 = vunpack.c.l.b16 %v964
    %v1068 = vunpack.c.l.b16 %v965
    %v1069 = vunpack.c.l.b16 %v966
    %v1070 = vunpack.c.l.b16 %v967
    %v1071 = vunpack.c.l.b16 %v968
    %v1072 = vunpack.c.l.b16 %v969
    %v1073 = vunpack.c.l.b16 %v970
    %v1074 = vunpack.c.l.b16 %v971
    %v1075 = vpack.c.b16 %v1028, %v1027
    %v1076 = vpack.c.b16 %v1030, %v1029
    %v1077 = vpack.c.b16 %v1032, %v1031
    %v1078 = vpack.c.b16 %v1034, %v1033
    %v1079 = vpack.c.b16 %v1036, %v1035
    %v1080 = vpack.c.b16 %v1038, %v1037
    %v1081 = vpack.c.b16 %v1040, %v1039
    %v1082 = vpack.c.b16 %v1042, %v1041
    %v1083 = vpack.c.b16 %v1044, %v1043
    %v1084 = vpack.c.b16 %v1046, %v1045
    %v1085 = vpack.c.b16 %v1048, %v1047
    %v1086 = vpack.c.b16 %v1050, %v1049
    %v1087 = vpack.c.b16 %v1052, %v1051
    %v1088 = vpack.c.b16 %v1054, %v1053
    %v1089 = vpack.c.b16 %v1056, %v1055
    %v1090 = vpack.c.b16 %v1058, %v1057
    %v1091 = vpack.c.b16 %v1060, %v1059
    %v1092 = vpack.c.b16 %v1062, %v1061
    %v1093 = vpack.c.b16 %v1064, %v1063
    %v1094 = vpack.c.b16 %v1066, %v1065
    %v1095 = vpack.c.b16 %v1068, %v1067
    %v1096 = vpack.c.b16 %v1070, %v1069
    %v1097 = vpack.c.b16 %v1072, %v1071
    %v1098 = vpack.c.b16 %v1074, %v1073
    %1123 = vmatprep.subr.bf16.mxu0 0
    %1124 = vmatpush1.bf16.msra.mxu0 %v1075
    %1125 = vmatprep.subr.bf16.mxu0 0
    %1126 = vmatpush1.bf16.msra.mxu0 %v1076
    %1127 = vmatprep.subr.bf16.mxu0 0
    %1128 = vmatpush1.bf16.msra.mxu0 %v1077
    %1129 = vmatprep.subr.bf16.mxu0 0
    %1130 = vmatpush1.bf16.msra.mxu0 %v1078
    %1131 = vmatprep.subr.bf16.mxu0 0
    %1132 = vmatpush1.bf16.msra.mxu0 %v1079
    %1133 = vmatprep.subr.bf16.mxu0 0
    %1134 = vmatpush1.bf16.msra.mxu0 %v1080
    %1135 = vmatprep.subr.bf16.mxu0 0
    %1136 = vmatpush1.bf16.msra.mxu0 %v1081
    %1137 = vmatprep.subr.bf16.mxu0 0
    %1138 = vmatpush1.bf16.msra.mxu0 %v1082
    %1139 = vmatprep.subr.bf16.mxu0 0
    %1140 = vmatpush1.bf16.msra.mxu0 %v1083
    %1141 = vmatprep.subr.bf16.mxu0 0
    %1142 = vmatpush1.bf16.msra.mxu0 %v1084
    %1143 = vmatprep.subr.bf16.mxu0 0
    %1144 = vmatpush1.bf16.msra.mxu0 %v1085
    %1145 = vmatprep.subr.bf16.mxu0 0
    %1146 = vmatpush1.bf16.msra.mxu0 %v1086
    %1147 = vmatprep.subr.bf16.mxu0 0
    %1148 = vmatpush1.bf16.msra.mxu0 %v1087
    %1149 = vmatprep.subr.bf16.mxu0 0
    %1150 = vmatpush1.bf16.msra.mxu0 %v1088
    %1151 = vmatprep.subr.bf16.mxu0 0
    %1152 = vmatpush1.bf16.msra.mxu0 %v1089
    %1153 = vmatprep.subr.bf16.mxu0 0
    %1154 = vmatpush1.bf16.msra.mxu0 %v1090
    %1155 = vmatprep.mubr.bf16.mxu0 %v922
    %1156 = vmatmul.mubr.bf16.gmra.mrb[0].mxu0 %v921
    %v1157 = vpop.f32.mrb[0].mxu0
    %v1158 = vadd.f32 %v977, %v1157
    %v1159 = vpop.f32.mrb[0].mxu0
    %v1160 = vpop.f32.mrb[0].mxu0
    %v1161 = vpop.f32.mrb[0].mxu0
    %1162 = vdwg.mxu0
    %1163 = vmatprep.subr.bf16.mxu0 0
    %1164 = vmatpush1.bf16.msra.mxu0 %v1091
    %1165 = vmatprep.subr.bf16.mxu0 0
    %1166 = vmatpush1.bf16.msra.mxu0 %v1092
    %1167 = vmatprep.subr.bf16.mxu0 0
    %1168 = vmatpush1.bf16.msra.mxu0 %v1093
    %1169 = vmatprep.subr.bf16.mxu0 0
    %1170 = vmatpush1.bf16.msra.mxu0 %v1094
    %1171 = vmatprep.subr.bf16.mxu0 0
    %1172 = vmatpush1.bf16.msra.mxu0 %v1095
    %1173 = vmatprep.subr.bf16.mxu0 0
    %1174 = vmatpush1.bf16.msra.mxu0 %v1096
    %1175 = vmatprep.subr.bf16.mxu0 0
    %1176 = vmatpush1.bf16.msra.mxu0 %v1097
    %1177 = vmatprep.subr.bf16.mxu0 0
    %1178 = vmatpush1.bf16.msra.mxu0 %v1098
    %1179 = vmatprep.subr.bf16.mxu0 0
    %1180 = vmatpush1.bf16.msra.mxu0 0
    %1181 = vmatprep.subr.bf16.mxu0 0
    %1182 = vmatpush1.bf16.msra.mxu0 0
    %1183 = vmatprep.subr.bf16.mxu0 0
    %1184 = vmatpush1.bf16.msra.mxu0 0
    %1185 = vmatprep.subr.bf16.mxu0 0
    %1186 = vmatpush1.bf16.msra.mxu0 0
    %1187 = vmatprep.subr.bf16.mxu0 0
    %1188 = vmatpush1.bf16.msra.mxu0 0
    %1189 = vmatprep.subr.bf16.mxu0 0
    %1190 = vmatpush1.bf16.msra.mxu0 0
    %1191 = vmatprep.subr.bf16.mxu0 0
    %1192 = vmatpush1.bf16.msra.mxu0 0
    %1193 = vmatprep.subr.bf16.mxu0 0
    %1194 = vmatpush1.bf16.msra.mxu0 0
    %1195 = vmatprep.mubr.bf16.mxu0 0
    %1196 = vmatmul.mubr.bf16.gmra.mrb[0].mxu0 %v923
    %v1197 = vpop.f32.mrb[0].mxu0
    %v1198 = vadd.f32 %v1158, %v1197
    %v1199 = vpop.f32.mrb[0].mxu0
    %v1200 = vpop.f32.mrb[0].mxu0
    %v1201 = vpop.f32.mrb[0].mxu0
    %1202 = vdwg.mxu0
    %1203 = vst [vmem:[#allocation8] sm:$0x3] %v1198
    // Predicated region
    $region42: #{cnn_fnn_forward.1} parent=1 // pred_check
      _
    $region43: #{cnn_fnn_forward.1} parent=1 // pred_check_branch
      %1205 = sbr.rel (0) target = $region45
    $region44: #{cnn_fnn_forward.1} parent=1 // pred_region
      %s1207 = ssub.s32 32, 32
      %1208 = vsyncadd [#allocation4], %s1207
      %s1210 = sshll.u32 [#allocation8], 4
      %s1211 = int_to_ptr.vmem [resolvable:$true] %s1210
      %1213 = dma.vmem_to_hbm [thread:$0]  %s1211, 32, %s7, [#allocation4]
    $region45: #{cnn_fnn_forward.1} parent=1 // pred_fallthru
      _
    // Predicated region
    $region46: #{cnn_fnn_forward.1} parent=1 // pred_check
      _
    $region47: #{cnn_fnn_forward.1} parent=1 // pred_check_branch
      %1215 = sbr.rel (0) target = $region49
    $region48: #{cnn_fnn_forward.1} parent=1 // pred_region
      %1216 = dma.done [#allocation4], 32
    $region49: #{cnn_fnn_forward.1} parent=1 // pred_fallthru
      _
    %1217 = vsyncpa [#allocation3], 1
    %1218 = vsyncpa [#allocation6], 1
    %1219 = vsyncpa [#allocation4], 1

</llo_original>
